<compile_context>
chip_gen: v6e
topology: v6e:2x2x1
jax: 0.10.0
libtpu: 0.0.40
codegen_flags: <defaults>
</compile_context>

<pallas_src>
import functools

import jax
import jax.numpy as jnp
from jax.experimental import pallas as pl
from jax.experimental.pallas import tpu as pltpu

EPS = 1e-12            # matches torch norm(...).clamp_min(1e-12)
_MAX_ROW_TILE = 65536  # sanity ceiling only; real limit is the VMEM budget


@functools.lru_cache(maxsize=1)
def _tpu_generation_config():
    """Return (num_core_splits, working_set_budget_bytes, vmem_limit_bytes)."""
    kind = ""
    try:
        kind = jax.devices()[0].device_kind.lower()
    except Exception:  # pragma: no cover - defensive
        pass
    if "v7" in kind:
        # 2 TensorCores per chip, but only 64 MiB VMEM per TC: split the grid
        # across cores, keep blocks + f32 temporaries well under 48 MiB.
        return 2, 28 * 1024 * 1024, 48 * 1024 * 1024
    if ("v5" in kind) or ("v6" in kind):
        # single TensorCore, 128 MiB VMEM: no core split (a split would just be
        # a serial outer loop that duplicates the clamped last tile), big blocks.
        return 1, 56 * 1024 * 1024, 96 * 1024 * 1024
    # Unknown generation: conservative, v7x-safe settings, no core split.
    return 1, 24 * 1024 * 1024, 48 * 1024 * 1024


def _row_tile_for(n, d, itemsizes, working_set_budget):
    """Largest row tile respecting sublane packing and the VMEM working-set budget."""
    min_rows = max({4: 8, 2: 16, 1: 32}.get(s, 8) for s in itemsizes)
    itemsize = max(itemsizes)
    # Per-row VMEM bytes: 2 inputs x 2 pipeline buffers in the input dtype, plus
    # ~4 f32-sized temporaries from the in-kernel f32 cast / elementwise products.
    per_row_bytes = d * (2 * 2 * itemsize + 4 * 4)
    rows = max(1, working_set_budget // max(1, per_row_bytes))
    rows = min(rows, _MAX_ROW_TILE)
    n_rounded = -(-n // min_rows) * min_rows       # don't overshoot tiny inputs
    rows = min(rows, n_rounded)
    rows = max(min_rows, (rows // min_rows) * min_rows)
    return rows


def _cosine_loss_kernel(pred_ref, targ_ref, out_ref, acc_ref, *,
                        n_rows, tiles_per_core, num_tiles):
    c = pl.program_id(0)                 # core-split axis ("parallel")
    i = pl.program_id(1)                 # row-tile reduction axis ("arbitrary")
    row_tile = pred_ref.shape[0]

    @pl.when(i == 0)
    def _init():
        acc_ref[...] = jnp.zeros_like(acc_ref)

    p = pred_ref[...].astype(jnp.float32)             # (row_tile, D)
    t = targ_ref[...].astype(jnp.float32)

    # cos = <p,t> / (max(||p||,eps) * max(||t||,eps)); clamp the squared norms
    # at eps^2 and use rsqrt (EUP) -> no elementwise divides / norm broadcasts.
    dot = jnp.sum(p * t, axis=-1, keepdims=True)      # (row_tile, 1)
    pp = jnp.sum(p * p, axis=-1, keepdims=True)
    tt = jnp.sum(t * t, axis=-1, keepdims=True)
    inv = (jax.lax.rsqrt(jnp.maximum(pp, EPS * EPS)) *
           jax.lax.rsqrt(jnp.maximum(tt, EPS * EPS)))
    per_row = 1.0 - dot * inv                         # (row_tile, 1)

    logical_tile = c * tiles_per_core + i
    last_logical = num_tiles - 1

    # Interior tiles: no masking work at all (review #5).
    @pl.when(logical_tile < last_logical)
    def _interior():
        acc_ref[...] += jnp.sum(per_row, keepdims=True)

    # Last logical tile (partial tail) and core-1's clamped duplicate tiles:
    # mask padded / duplicated rows with a select (keeps NaN/Inf out).
    @pl.when(logical_tile >= last_logical)
    def _boundary():
        row_ids = logical_tile * row_tile + jax.lax.broadcasted_iota(
            jnp.int32, (row_tile, 1), 0)
        masked = jnp.where(row_ids < n_rows, per_row, 0.0)
        acc_ref[...] += jnp.sum(masked, keepdims=True)

    @pl.when(i == pl.num_programs(1) - 1)
    def _finalize():
        # single lane-dense store of this core's partial sum
        out_ref[...] = acc_ref[...] + jnp.zeros(out_ref.shape, out_ref.dtype)


def _pallas_partials(pred, target, *, row_tile, num_splits, tiles_per_core,
                     num_tiles, vmem_limit, buffered):
    n, d = pred.shape
    last_tile = num_tiles - 1

    def in_map(c, i):
        # clamp so the second core split never DMAs past the array; the
        # in-kernel row mask zeroes any duplicated / padded rows.
        return (jnp.minimum(c * tiles_per_core + i, last_tile), 0)

    spec_kwargs = {"pipeline_mode": pl.Buffered(3)} if buffered else {}

    kernel = functools.partial(
        _cosine_loss_kernel, n_rows=n,
        tiles_per_core=tiles_per_core, num_tiles=num_tiles)

    return pl.pallas_call(
        kernel,
        out_shape=jax.ShapeDtypeStruct((num_splits, 8, 128), jnp.float32),
        grid_spec=pltpu.PrefetchScalarGridSpec(
            num_scalar_prefetch=0,
            grid=(num_splits, tiles_per_core),
            in_specs=[
                pl.BlockSpec((row_tile, d), in_map, **spec_kwargs),
                pl.BlockSpec((row_tile, d), in_map, **spec_kwargs),
            ],
            out_specs=pl.BlockSpec((1, 8, 128), lambda c, i: (c, 0, 0)),
            scratch_shapes=[pltpu.VMEM((1, 1), jnp.float32)],
        ),
        compiler_params=pltpu.CompilerParams(
            dimension_semantics=("parallel", "arbitrary"),
            vmem_limit_bytes=vmem_limit,
        ),
    )(pred, target)


def cosine_criterion(pred, target, *, row_tile=None):
    assert pred.shape == target.shape and pred.ndim == 2, (
        f"expected pred.shape == target.shape and 2-D, got {pred.shape} vs {target.shape}"
    )
    n, d = pred.shape
    num_splits, ws_budget, vmem_limit = _tpu_generation_config()
    itemsizes = [pred.dtype.itemsize, target.dtype.itemsize]

    if row_tile is None:
        row_tile = _row_tile_for(n, d, itemsizes, ws_budget)

    num_tiles = -(-n // row_tile)                         # ceil
    tiles_per_core = -(-num_tiles // num_splits)          # ceil

    # Review #8: with many short steps on small blocks, try a 3-deep pipeline.
    block_bytes = row_tile * d * max(itemsizes)
    want_buffered = tiles_per_core >= 3 and block_bytes < 512 * 1024

    call = functools.partial(
        _pallas_partials, pred, target, row_tile=row_tile, num_splits=num_splits,
        tiles_per_core=tiles_per_core, num_tiles=num_tiles, vmem_limit=vmem_limit)

    if want_buffered:
        try:
            partials = call(buffered=True)
        except Exception:
            partials = call(buffered=False)   # safe fallback to double-buffering
    else:
        partials = call(buffered=False)

    # one partial per core split; combine in the wrapper
    return jnp.sum(partials[:, 0, 0])


def _reference(pred, target):
    p = pred.astype(jnp.float32)
    t = target.astype(jnp.float32)
    pn = jnp.maximum(jnp.linalg.norm(p, axis=-1, keepdims=True), EPS)
    tn = jnp.maximum(jnp.linalg.norm(t, axis=-1, keepdims=True), EPS)
    return jnp.sum(1.0 - jnp.sum((p / pn) * (t / tn), axis=-1))


if __name__ == "__main__":
    key = jax.random.PRNGKey(0)
    k1, k2, k3, k4, k5, k6 = jax.random.split(key, 6)

    # case 1: f32, N not a multiple of the row tile (exercises tail masking)
    pred32 = jax.random.normal(k1, (37, 96), dtype=jnp.float32)
    targ32 = jax.random.normal(k2, (37, 96), dtype=jnp.float32)
    loss32 = jax.block_until_ready(cosine_criterion(pred32, targ32))
    ref32 = _reference(pred32, targ32)
    assert jnp.allclose(loss32, ref32, rtol=1e-4, atol=1e-4), (loss32, ref32)

    # case 2: bf16 inputs streamed directly (half the HBM bytes); math in f32
    pred16 = jax.random.normal(k3, (64, 128), dtype=jnp.bfloat16)
    targ16 = jax.random.normal(k4, (64, 128), dtype=jnp.bfloat16)
    loss16 = jax.block_until_ready(cosine_criterion(pred16, targ16))
    ref16 = _reference(pred16, targ16)
    assert jnp.allclose(loss16, ref16, rtol=2e-3, atol=2e-3), (loss16, ref16)

    # case 3: explicit small row tile -> multi-tile grid, core-split/tail masking
    # and the Buffered(3) small-block pipeline path are all exercised.
    predm = jax.random.normal(k5, (1000, 32), dtype=jnp.float32)
    targm = jax.random.normal(k6, (1000, 32), dtype=jnp.float32)
    lossm = jax.block_until_ready(cosine_criterion(predm, targm, row_tile=128))
    refm = _reference(predm, targm)
    assert jnp.allclose(lossm, refm, rtol=1e-4, atol=1e-4), (lossm, refm)

    print("KERNEL_OK")
</pallas_src>

<mosaic_0001>
module attributes {stable_mosaic.version = 11 : i64} {
  func.func @_cosine_loss_kernel(%arg0: i32, %arg1: i32, %arg2: memref<40x96xf32, #tpu.memory_space<vmem>>, %arg3: memref<40x96xf32, #tpu.memory_space<vmem>>, %arg4: memref<1x8x128xf32, #tpu.memory_space<vmem>>, %arg5: memref<1x1xf32, #tpu.memory_space<vmem>>) attributes {dimension_semantics = [#tpu.dimension_semantics<parallel>, #tpu.dimension_semantics<arbitrary>], iteration_bounds = array<i64: 1, 1>, scalar_prefetch = 0 : i64, scratch_operands = 1 : i64, tpu.core_type = #tpu.core_type<tc>, window_params = [{transform_indices = @transform_0, window_bounds = array<i64: 40, 96>}, {transform_indices = @transform_1, window_bounds = array<i64: 40, 96>}, {transform_indices = @transform_2, window_bounds = array<i64: 1, 8, 128>}]} {
    %c0_i32 = arith.constant 0 : i32
    %0 = arith.cmpi eq, %arg1, %c0_i32 : i32
    %1 = arith.extui %0 : i1 to i32
    %c0_i32_0 = arith.constant 0 : i32
    %2 = arith.cmpi ne, %1, %c0_i32_0 : i32
    scf.if %2 {
      %cst_15 = arith.constant 0.000000e+00 : f32
      %35 = vector.broadcast %cst_15 : f32 to vector<1x1xf32>
      %c0_16 = arith.constant 0 : index
      %c0_17 = arith.constant 0 : index
      %36 = vector.load %arg5[%c0_16, %c0_17] : memref<1x1xf32, #tpu.memory_space<vmem>>, vector<1x1xf32>
      tpu.vector_store %arg5[%c0_16, %c0_17], %35 {strides = array<i32>} : memref<1x1xf32, #tpu.memory_space<vmem>>, vector<1x1xf32>,
    } else {
    }
    %c0 = arith.constant 0 : index
    %c0_1 = arith.constant 0 : index
    %3 = vector.load %arg2[%c0, %c0_1] : memref<40x96xf32, #tpu.memory_space<vmem>>, vector<40x96xf32>
    %c0_2 = arith.constant 0 : index
    %c0_3 = arith.constant 0 : index
    %4 = vector.load %arg3[%c0_2, %c0_3] : memref<40x96xf32, #tpu.memory_space<vmem>>, vector<40x96xf32>
    %5 = arith.mulf %3, %4 : vector<40x96xf32>
    %cst = arith.constant dense<0.000000e+00> : vector<40xf32>
    %6 = vector.multi_reduction <add>, %5, %cst [1] : vector<40x96xf32> to vector<40xf32>
    %7 = vector.shape_cast %6 : vector<40xf32> to vector<40x1xf32>
    %8 = arith.mulf %3, %3 : vector<40x96xf32>
    %cst_4 = arith.constant dense<0.000000e+00> : vector<40xf32>
    %9 = vector.multi_reduction <add>, %8, %cst_4 [1] : vector<40x96xf32> to vector<40xf32>
    %10 = vector.shape_cast %9 : vector<40xf32> to vector<40x1xf32>
    %11 = arith.mulf %4, %4 : vector<40x96xf32>
    %cst_5 = arith.constant dense<0.000000e+00> : vector<40xf32>
    %12 = vector.multi_reduction <add>, %11, %cst_5 [1] : vector<40x96xf32> to vector<40xf32>
    %13 = vector.shape_cast %12 : vector<40xf32> to vector<40x1xf32>
    %cst_6 = arith.constant 1.000000e-24 : f32
    %14 = vector.broadcast %cst_6 : f32 to vector<40x1xf32>
    %15 = arith.maximumf %10, %14 : vector<40x1xf32>
    %16 = math.rsqrt %15 : vector<40x1xf32>
    %cst_7 = arith.constant 1.000000e-24 : f32
    %17 = vector.broadcast %cst_7 : f32 to vector<40x1xf32>
    %18 = arith.maximumf %13, %17 : vector<40x1xf32>
    %19 = math.rsqrt %18 : vector<40x1xf32>
    %20 = arith.mulf %16, %19 : vector<40x1xf32>
    %21 = arith.mulf %7, %20 : vector<40x1xf32>
    %cst_8 = arith.constant 1.000000e+00 : f32
    %22 = vector.broadcast %cst_8 : f32 to vector<40x1xf32>
    %23 = arith.subf %22, %21 : vector<40x1xf32>
    %c1_i32 = arith.constant 1 : i32
    %24 = arith.muli %arg0, %c1_i32 : i32
    %25 = arith.addi %24, %arg1 : i32
    %c0_i32_9 = arith.constant 0 : i32
    %26 = arith.cmpi slt, %25, %c0_i32_9 : i32
    %27 = arith.extui %26 : i1 to i32
    %c0_i32_10 = arith.constant 0 : i32
    %28 = arith.cmpi ne, %27, %c0_i32_10 : i32
    scf.if %28 {
      %c0_15 = arith.constant 0 : index
      %c0_16 = arith.constant 0 : index
      %35 = vector.load %arg5[%c0_15, %c0_16] : memref<1x1xf32, #tpu.memory_space<vmem>>, vector<1x1xf32>
      %36 = vector.shape_cast %23 : vector<40x1xf32> to vector<1x40x1xf32>
      %cst_17 = arith.constant dense<0.000000e+00> : vector<1xf32>
      %37 = vector.multi_reduction <add>, %36, %cst_17 [1, 2] : vector<1x40x1xf32> to vector<1xf32>
      %38 = vector.shape_cast %37 : vector<1xf32> to vector<1x1x1xf32>
      %39 = vector.extract %38[0, 0, 0] : f32 from vector<1x1x1xf32>
      %40 = vector.broadcast %39 : f32 to vector<1x1xf32>
      %41 = arith.addf %35, %40 : vector<1x1xf32>
      %c0_18 = arith.constant 0 : index
      %c0_19 = arith.constant 0 : index
      %42 = vector.load %arg5[%c0_18, %c0_19] : memref<1x1xf32, #tpu.memory_space<vmem>>, vector<1x1xf32>
      tpu.vector_store %arg5[%c0_18, %c0_19], %41 {strides = array<i32>} : memref<1x1xf32, #tpu.memory_space<vmem>>, vector<1x1xf32>,
    } else {
    }
    %c0_i32_11 = arith.constant 0 : i32
    %29 = arith.cmpi sge, %25, %c0_i32_11 : i32
    %30 = arith.extui %29 : i1 to i32
    %c0_i32_12 = arith.constant 0 : i32
    %31 = arith.cmpi ne, %30, %c0_i32_12 : i32
    scf.if %31 {
      %c40_i32 = arith.constant 40 : i32
      %35 = arith.muli %25, %c40_i32 : i32
      %36 = tpu.iota {dimensions = array<i32: 0>} : vector<40x1xi32>
      %37 = vector.broadcast %35 : i32 to vector<40x1xi32>
      %38 = arith.addi %37, %36 : vector<40x1xi32>
      %c37_i32 = arith.constant 37 : i32
      %39 = vector.broadcast %c37_i32 : i32 to vector<40x1xi32>
      %40 = arith.cmpi slt, %38, %39 : vector<40x1xi32>
      %cst_15 = arith.constant 0.000000e+00 : f32
      %41 = vector.broadcast %cst_15 : f32 to vector<40x1xf32>
      %42 = arith.select %40, %23, %41 : vector<40x1xi1>, vector<40x1xf32>
      %c0_16 = arith.constant 0 : index
      %c0_17 = arith.constant 0 : index
      %43 = vector.load %arg5[%c0_16, %c0_17] : memref<1x1xf32, #tpu.memory_space<vmem>>, vector<1x1xf32>
      %44 = vector.shape_cast %42 : vector<40x1xf32> to vector<1x40x1xf32>
      %cst_18 = arith.constant dense<0.000000e+00> : vector<1xf32>
      %45 = vector.multi_reduction <add>, %44, %cst_18 [1, 2] : vector<1x40x1xf32> to vector<1xf32>
      %46 = vector.shape_cast %45 : vector<1xf32> to vector<1x1x1xf32>
      %47 = vector.extract %46[0, 0, 0] : f32 from vector<1x1x1xf32>
      %48 = vector.broadcast %47 : f32 to vector<1x1xf32>
      %49 = arith.addf %43, %48 : vector<1x1xf32>
      %c0_19 = arith.constant 0 : index
      %c0_20 = arith.constant 0 : index
      %50 = vector.load %arg5[%c0_19, %c0_20] : memref<1x1xf32, #tpu.memory_space<vmem>>, vector<1x1xf32>
      tpu.vector_store %arg5[%c0_19, %c0_20], %49 {strides = array<i32>} : memref<1x1xf32, #tpu.memory_space<vmem>>, vector<1x1xf32>,
    } else {
    }
    %c0_i32_13 = arith.constant 0 : i32
    %32 = arith.cmpi eq, %arg1, %c0_i32_13 : i32
    %33 = arith.extui %32 : i1 to i32
    %c0_i32_14 = arith.constant 0 : i32
    %34 = arith.cmpi ne, %33, %c0_i32_14 : i32
    scf.if %34 {
      %c0_15 = arith.constant 0 : index
      %c0_16 = arith.constant 0 : index
      %35 = vector.load %arg5[%c0_15, %c0_16] : memref<1x1xf32, #tpu.memory_space<vmem>>, vector<1x1xf32>
      %cst_17 = arith.constant 0.000000e+00 : f32
      %36 = vector.broadcast %cst_17 : f32 to vector<1x8x128xf32>
      %37 = vector.shape_cast %35 : vector<1x1xf32> to vector<1x1x1xf32>
      %38 = vector.broadcast %37 : vector<1x1x1xf32> to vector<1x8x128xf32>
      %39 = arith.addf %38, %36 : vector<1x8x128xf32>
      %c0_18 = arith.constant 0 : index
      %c0_19 = arith.constant 0 : index
      %c0_20 = arith.constant 0 : index
      %40 = vector.load %arg4[%c0_18, %c0_19, %c0_20] : memref<1x8x128xf32, #tpu.memory_space<vmem>>, vector<1x8x128xf32>
      tpu.vector_store %arg4[%c0_18, %c0_19, %c0_20], %39 {strides = array<i32>} : memref<1x8x128xf32, #tpu.memory_space<vmem>>, vector<1x8x128xf32>,
    } else {
    }
    return
  }
  func.func @transform_0(%arg0: i32, %arg1: i32) -> (i32, i32) {
    %c1_i32 = arith.constant 1 : i32
    %0 = arith.muli %arg0, %c1_i32 : i32
    %1 = arith.addi %0, %arg1 : i32
    %c0_i32 = arith.constant 0 : i32
    %2 = arith.minsi %1, %c0_i32 : i32
    %c0_i32_0 = arith.constant 0 : i32
    %c0_i32_1 = arith.constant 0 : i32
    return %2, %c0_i32_0 : i32, i32
  }
  func.func @transform_1(%arg0: i32, %arg1: i32) -> (i32, i32) {
    %c1_i32 = arith.constant 1 : i32
    %0 = arith.muli %arg0, %c1_i32 : i32
    %1 = arith.addi %0, %arg1 : i32
    %c0_i32 = arith.constant 0 : i32
    %2 = arith.minsi %1, %c0_i32 : i32
    %c0_i32_0 = arith.constant 0 : i32
    %c0_i32_1 = arith.constant 0 : i32
    return %2, %c0_i32_0 : i32, i32
  }
  func.func @transform_2(%arg0: i32, %arg1: i32) -> (i32, i32, i32) {
    %c0_i32 = arith.constant 0 : i32
    %c0_i32_0 = arith.constant 0 : i32
    %c0_i32_1 = arith.constant 0 : i32
    return %arg0, %c0_i32, %c0_i32_0 : i32, i32, i32
  }
}

</mosaic_0001>

<llo_original>
// kernel: tpu_custom_call.1
$region0: #{tpu_custom_call.1}
  #allocation0 [shape = 'u32[]', space=smem, size = 0x4, offset = 0x4, fixed_abs, tag = 'smem constant byte address 0x4 - core index']
  #allocation1 [shape = 'u32[144,128]{1,0:T(1,128)}', space=vmem, size = 0x12000, scoped, tag = 'internal scratch']
  #allocation2 [shape = 'f32[1,1]{1,0:T(1,128)}', space=vmem, size = 0x200, scoped, tag = 'scratch operand']
  %s0 = inlined_call_operand.hbm [shape: f32[37,96], index: 0, kind: input, shape index: {}]
  %s1 = inlined_call_operand.hbm [shape: f32[37,96], index: 1, kind: input, shape index: {}]
  %s2 = inlined_call_operand.hbm [shape: f32[1,8,128], index: 2, kind: output, shape index: {}]
  %s3 = sld [smem:[#allocation0]]
  $region42: #{tpu_custom_call.1} parent=0
    _
  %s5 = ssub.s32 1, %s3
  %s6 = scalar_select 0, %s5, %s3
  $region1: #{tpu_custom_call.1} parent=0
    #allocation3 [shape = 'u8[20480]{0}', space=vmem, size = 0x5000, scoped, tag = 'input window, operand 0, single buffered']
    #allocation4 [shape = 's32[1]{0}', space=sflag, size = 0x4, scoped, tag = 'scoped memory for tpu_custom_call.1']
    #allocation5 [shape = 's32[1]{0}', space=sflag, size = 0x4, scoped, tag = 'scoped memory for tpu_custom_call.1']
    #allocation6 [shape = 'u8[20480]{0}', space=vmem, size = 0x5000, scoped, tag = 'input window, operand 1, single buffered']
    #allocation7 [shape = 's32[1]{0}', space=sflag, size = 0x4, scoped, tag = 'scoped memory for tpu_custom_call.1']
    #allocation8 [shape = 'u8[4096]{0}', space=vmem, size = 0x1000, scoped, tag = 'output window, operand 0, single buffered']
    %7 = vsyncpa [#allocation4], 0
    %8 = vsyncpa [#allocation7], 0
    %9 = vsyncpa [#allocation5], 0
    // Predicated region
    $region2: #{tpu_custom_call.1} parent=1 // pred_check
      _
    $region3: #{tpu_custom_call.1} parent=1 // pred_check_branch
      %11 = sbr.rel (0) target = $region5
    $region4: #{tpu_custom_call.1} parent=1 // pred_region
      %s12 = sadd.s32 0, 0
      %p13 = scmp.lt.s32.totalorder %s12, 0
      %s14 = scalar_select %p13, %s12, 0
      %s15 = smul.u32 5, %s14
      %s17 = ssub.s32 640, 640
      %18 = vsyncadd [#allocation4], %s17
      %s19 = smul.addr %s15, 128
      %s20 = scalar_lea.hbm %s0, %s19
      %s21 = sshll.u32 [#allocation3], 4
      %s22 = int_to_ptr.vmem [resolvable:$true] %s21
      %27 = dma.hbm_to_vmem [thread:$0]  %s20, 640, %s22, [#allocation4], 128, 128, 8
    $region5: #{tpu_custom_call.1} parent=1 // pred_fallthru
      _
    // Predicated region
    $region6: #{tpu_custom_call.1} parent=1 // pred_check
      _
    $region7: #{tpu_custom_call.1} parent=1 // pred_check_branch
      %29 = sbr.rel (0) target = $region9
    $region8: #{tpu_custom_call.1} parent=1 // pred_region
      %s30 = sadd.s32 0, 0
      %p31 = scmp.lt.s32.totalorder %s30, 0
      %s32 = scalar_select %p31, %s30, 0
      %s33 = smul.u32 5, %s32
      %s35 = ssub.s32 640, 640
      %36 = vsyncadd [#allocation7], %s35
      %s37 = smul.addr %s33, 128
      %s38 = scalar_lea.hbm %s1, %s37
      %s39 = sshll.u32 [#allocation6], 4
      %s40 = int_to_ptr.vmem [resolvable:$true] %s39
      %45 = dma.hbm_to_vmem [thread:$0]  %s38, 640, %s40, [#allocation7], 128, 128, 8
    $region9: #{tpu_custom_call.1} parent=1 // pred_fallthru
      _
    // Predicated region
    $region10: #{tpu_custom_call.1} parent=1 // pred_check
      _
    $region11: #{tpu_custom_call.1} parent=1 // pred_check_branch
      %47 = sbr.rel (0) target = $region13
    $region12: #{tpu_custom_call.1} parent=1 // pred_region
      %48 = dma.done [#allocation4], 640
    $region13: #{tpu_custom_call.1} parent=1 // pred_fallthru
      _
    // Predicated region
    $region14: #{tpu_custom_call.1} parent=1 // pred_check
      _
    $region15: #{tpu_custom_call.1} parent=1 // pred_check_branch
      %50 = sbr.rel (0) target = $region17
    $region16: #{tpu_custom_call.1} parent=1 // pred_region
      %51 = dma.done [#allocation7], 640
    $region17: #{tpu_custom_call.1} parent=1 // pred_fallthru
      _
    %s52 = sadd.s32 0, 0
    %p53 = scmp.lt.s32.totalorder %s52, 0
    %s54 = scalar_select %p53, %s52, 0
    %s55 = smul.u32 5, %s54
    %s56 = sadd.s32 0, 0
    %p57 = scmp.lt.s32.totalorder %s56, 0
    %s58 = scalar_select %p57, %s56, 0
    %s59 = smul.u32 5, %s58
    %p60 = scmp.eq.s32.totalorder 0, 0
    // Predicated region
    $region18: #{tpu_custom_call.1} parent=1 // pred_check
      %p61 = pneg %p60
    $region19: #{tpu_custom_call.1} parent=1 // pred_check_branch
      %63 = sbr.rel (%p61) target = $region21
    $region20: #{tpu_custom_call.1} parent=1 // pred_region
      %vm64 = vcmask 0
      %65 = vst.msk [vmem:[#allocation2] sm:$0x1] %vm64, 0.0
    $region21: #{tpu_custom_call.1} parent=1 // pred_fallthru
      _
    %v66 = vld [vmem:[#allocation3] sm:$0xff]
    %v67 = vld [vmem:[#allocation3 + $0x8] sm:$0xff]
    %v68 = vld [vmem:[#allocation3 + $0x10] sm:$0xff]
    %v69 = vld [vmem:[#allocation3 + $0x18] sm:$0xff]
    %v70 = vld [vmem:[#allocation3 + $0x20] sm:$0xff]
    %v71 = vld [vmem:[#allocation6] sm:$0xff]
    %v72 = vld [vmem:[#allocation6 + $0x8] sm:$0xff]
    %v73 = vld [vmem:[#allocation6 + $0x10] sm:$0xff]
    %v74 = vld [vmem:[#allocation6 + $0x18] sm:$0xff]
    %v75 = vld [vmem:[#allocation6 + $0x20] sm:$0xff]
    %v76 = vmul.f32 %v66, %v71
    %v77 = vmul.f32 %v67, %v72
    %v78 = vmul.f32 %v68, %v73
    %v79 = vmul.f32 %v69, %v74
    %v80 = vmul.f32 %v70, %v75
    %vm81 = vcmask 785408
    %v82 = vsel %vm81, %v76, 0.0
    %83 = vadd.xlane.f32.xlu0 %v82
    %v84 = vpop.xlane.xlu0 %83
    %v85 = vsel %vm81, %v77, 0.0
    %86 = vadd.xlane.f32.xlu0 %v85
    %v87 = vpop.xlane.xlu0 %86
    %v88 = vsel %vm81, %v78, 0.0
    %89 = vadd.xlane.f32.xlu0 %v88
    %v90 = vpop.xlane.xlu0 %89
    %v91 = vsel %vm81, %v79, 0.0
    %92 = vadd.xlane.f32.xlu0 %v91
    %v93 = vpop.xlane.xlu0 %92
    %v94 = vsel %vm81, %v80, 0.0
    %95 = vadd.xlane.f32.xlu0 %v94
    %v96 = vpop.xlane.xlu0 %95
    %v97 = vmul.f32 %v66, %v66
    %v98 = vmul.f32 %v67, %v67
    %v99 = vmul.f32 %v68, %v68
    %v100 = vmul.f32 %v69, %v69
    %v101 = vmul.f32 %v70, %v70
    %v102 = vsel %vm81, %v97, 0.0
    %103 = vadd.xlane.f32.xlu0 %v102
    %v104 = vpop.xlane.xlu0 %103
    %v105 = vsel %vm81, %v98, 0.0
    %106 = vadd.xlane.f32.xlu0 %v105
    %v107 = vpop.xlane.xlu0 %106
    %v108 = vsel %vm81, %v99, 0.0
    %109 = vadd.xlane.f32.xlu0 %v108
    %v110 = vpop.xlane.xlu0 %109
    %v111 = vsel %vm81, %v100, 0.0
    %112 = vadd.xlane.f32.xlu0 %v111
    %v113 = vpop.xlane.xlu0 %112
    %v114 = vsel %vm81, %v101, 0.0
    %115 = vadd.xlane.f32.xlu0 %v114
    %v116 = vpop.xlane.xlu0 %115
    %v117 = vmul.f32 %v71, %v71
    %v118 = vmul.f32 %v72, %v72
    %v119 = vmul.f32 %v73, %v73
    %v120 = vmul.f32 %v74, %v74
    %v121 = vmul.f32 %v75, %v75
    %v122 = vsel %vm81, %v117, 0.0
    %123 = vadd.xlane.f32.xlu0 %v122
    %v124 = vpop.xlane.xlu0 %123
    %v125 = vsel %vm81, %v118, 0.0
    %126 = vadd.xlane.f32.xlu0 %v125
    %v127 = vpop.xlane.xlu0 %126
    %v128 = vsel %vm81, %v119, 0.0
    %129 = vadd.xlane.f32.xlu0 %v128
    %v130 = vpop.xlane.xlu0 %129
    %v131 = vsel %vm81, %v120, 0.0
    %132 = vadd.xlane.f32.xlu0 %v131
    %v133 = vpop.xlane.xlu0 %132
    %v134 = vsel %vm81, %v121, 0.0
    %135 = vadd.xlane.f32.xlu0 %v134
    %v136 = vpop.xlane.xlu0 %135
    %v137 = vmax.f32 %v104, 1e-24
    %v138 = vmax.f32 %v107, 1e-24
    %v139 = vmax.f32 %v110, 1e-24
    %v140 = vmax.f32 %v113, 1e-24
    %v141 = vmax.f32 %v116, 1e-24
    %v142 = vrsqrt.pop %v137
    %v143 = vrsqrt.pop %v138
    %v144 = vrsqrt.pop %v139
    %v145 = vrsqrt.pop %v140
    %v146 = vrsqrt.pop %v141
    %v147 = vmax.f32 %v124, 1e-24
    %v148 = vmax.f32 %v127, 1e-24
    %v149 = vmax.f32 %v130, 1e-24
    %v150 = vmax.f32 %v133, 1e-24
    %v151 = vmax.f32 %v136, 1e-24
    %v152 = vrsqrt.pop %v147
    %v153 = vrsqrt.pop %v148
    %v154 = vrsqrt.pop %v149
    %v155 = vrsqrt.pop %v150
    %v156 = vrsqrt.pop %v151
    %v157 = vmul.f32 %v142, %v152
    %v158 = vmul.f32 %v143, %v153
    %v159 = vmul.f32 %v144, %v154
    %v160 = vmul.f32 %v145, %v155
    %v161 = vmul.f32 %v146, %v156
    %v162 = vmul.f32 %v84, %v157
    %v163 = vmul.f32 %v87, %v158
    %v164 = vmul.f32 %v90, %v159
    %v165 = vmul.f32 %v93, %v160
    %v166 = vmul.f32 %v96, %v161
    %v167 = vsub.f32 1.0, %v162
    %v168 = vsub.f32 1.0, %v163
    %v169 = vsub.f32 1.0, %v164
    %v170 = vsub.f32 1.0, %v165
    %v171 = vsub.f32 1.0, %v166
    %s172 = sadd.s32 0, 0
    %p173 = scmp.lt.s32.totalorder %s172, 0
    // Predicated region
    $region22: #{tpu_custom_call.1} parent=1 // pred_check
      %p174 = pneg %p173
    $region23: #{tpu_custom_call.1} parent=1 // pred_check_branch
      %176 = sbr.rel (%p174) target = $region25
    $region24: #{tpu_custom_call.1} parent=1 // pred_region
      %v177 = vld [vmem:[#allocation2] sm:$0x1]
      %vm178 = vcmask 7168
      %v179 = vsel %vm178, %v167, 0.0
      %v180 = vsel %vm178, %v168, 0.0
      %v181 = vadd.f32 %v179, %v180
      %v182 = vsel %vm178, %v169, 0.0
      %v183 = vadd.f32 %v181, %v182
      %v184 = vsel %vm178, %v170, 0.0
      %v185 = vadd.f32 %v183, %v184
      %v186 = vsel %vm178, %v171, 0.0
      %v187 = vadd.f32 %v185, %v186
      %188 = vadd.xlane.f32.xlu0 %v187
      %v189 = vpop.xlane.xlu0 %188
      %v190 = vrot.slane %v189, 4
      %v191 = vadd.f32 %v189, %v190
      %v192 = vrot.slane %v191, 2
      %v193 = vadd.f32 %v191, %v192
      %v194 = vrot.slane %v193, 1
      %v195 = vadd.f32 %v193, %v194
      %s196 = vtos %v195
      %v197 = vstv %s196
      %v198 = vadd.f32 %v177, %v197
      %vm199 = vcmask 0
      %200 = vst.msk [vmem:[#allocation2] sm:$0x1] %vm199, %v198
    $region25: #{tpu_custom_call.1} parent=1 // pred_fallthru
      _
    %p201 = scmp.ge.s32.totalorder %s172, 0
    // Predicated region
    $region26: #{tpu_custom_call.1} parent=1 // pred_check
      %p202 = pneg %p201
    $region27: #{tpu_custom_call.1} parent=1 // pred_check_branch
      %204 = sbr.rel (%p202) target = $region29
    $region28: #{tpu_custom_call.1} parent=1 // pred_region
      %s205 = smul.u32 %s172, 40
      %v206 = vlaneseq
      %v207 = vshrl.u32 %v206, 7
      %v208 = vadd.s32 %v207, 8
      %v209 = vadd.s32 %v207, 16
      %v210 = vadd.s32 %v207, 24
      %v211 = vadd.s32 %v207, 32
      %v212 = vstv %s205
      %v213 = vadd.s32 %v212, %v207
      %v214 = vadd.s32 %v212, %v208
      %v215 = vadd.s32 %v212, %v209
      %v216 = vadd.s32 %v212, %v210
      %v217 = vadd.s32 %v212, %v211
      %vm218 = vcmp.lt.s32.totalorder %v213, 37
      %vm219 = vcmp.lt.s32.totalorder %v214, 37
      %vm220 = vcmp.lt.s32.totalorder %v215, 37
      %vm221 = vcmp.lt.s32.totalorder %v216, 37
      %vm222 = vcmp.lt.s32.totalorder %v217, 37
      %v223 = vsel %vm218, %v167, 0.0
      %v224 = vsel %vm219, %v168, 0.0
      %v225 = vsel %vm220, %v169, 0.0
      %v226 = vsel %vm221, %v170, 0.0
      %v227 = vsel %vm222, %v171, 0.0
      %v228 = vld [vmem:[#allocation2] sm:$0x1]
      %vm229 = vcmask 7168
      %v230 = vsel %vm229, %v223, 0.0
      %v231 = vsel %vm229, %v224, 0.0
      %v232 = vadd.f32 %v230, %v231
      %v233 = vsel %vm229, %v225, 0.0
      %v234 = vadd.f32 %v232, %v233
      %v235 = vsel %vm229, %v226, 0.0
      %v236 = vadd.f32 %v234, %v235
      %v237 = vsel %vm229, %v227, 0.0
      %v238 = vadd.f32 %v236, %v237
      %239 = vadd.xlane.f32.xlu0 %v238
      %v240 = vpop.xlane.xlu0 %239
      %v241 = vrot.slane %v240, 4
      %v242 = vadd.f32 %v240, %v241
      %v243 = vrot.slane %v242, 2
      %v244 = vadd.f32 %v242, %v243
      %v245 = vrot.slane %v244, 1
      %v246 = vadd.f32 %v244, %v245
      %s247 = vtos %v246
      %v248 = vstv %s247
      %v249 = vadd.f32 %v228, %v248
      %vm250 = vcmask 0
      %251 = vst.msk [vmem:[#allocation2] sm:$0x1] %vm250, %v249
    $region29: #{tpu_custom_call.1} parent=1 // pred_fallthru
      _
    // Predicated region
    $region30: #{tpu_custom_call.1} parent=1 // pred_check
      %p252 = pneg %p60
    $region31: #{tpu_custom_call.1} parent=1 // pred_check_branch
      %254 = sbr.rel (%p252) target = $region33
    $region32: #{tpu_custom_call.1} parent=1 // pred_region
      %v255 = vld [vmem:[#allocation2] sm:$0x1]
      %v257 = vlaneseq
      %v258 = vshrl.u32 %v257, 7
      %v259 = vsub.s32 0, %v258
      %v260 = vrot.slane %v255, %v259
      %261 = vset.pattern.permute.xlu0 0
      %262 = vperm.xlu0 %261, %v260
      %v263 = vpop.permute.xlu0 %262
      %v265 = vadd.f32 %v263, 0.0
      %266 = vst [vmem:[#allocation8] sm:$0xff] %v265
    $region33: #{tpu_custom_call.1} parent=1 // pred_fallthru
      _
    // Predicated region
    $region34: #{tpu_custom_call.1} parent=1 // pred_check
      _
    $region35: #{tpu_custom_call.1} parent=1 // pred_check_branch
      %268 = sbr.rel (0) target = $region37
    $region36: #{tpu_custom_call.1} parent=1 // pred_region
      %s270 = ssub.s32 128, 128
      %271 = vsyncadd [#allocation5], %s270
      %s273 = sshll.u32 [#allocation8], 4
      %s274 = int_to_ptr.vmem [resolvable:$true] %s273
      %276 = dma.vmem_to_hbm [thread:$0]  %s274, 128, %s2, [#allocation5]
    $region37: #{tpu_custom_call.1} parent=1 // pred_fallthru
      _
    // Predicated region
    $region38: #{tpu_custom_call.1} parent=1 // pred_check
      _
    $region39: #{tpu_custom_call.1} parent=1 // pred_check_branch
      %278 = sbr.rel (0) target = $region41
    $region40: #{tpu_custom_call.1} parent=1 // pred_region
      %279 = dma.done [#allocation5], 128
    $region41: #{tpu_custom_call.1} parent=1 // pred_fallthru
      _
    %280 = vsyncpa [#allocation4], 1
    %281 = vsyncpa [#allocation7], 1
    %282 = vsyncpa [#allocation5], 1

</llo_original>
